<compile_context>
chip_gen: v7x
topology: tpu7x:2x2x1
jax: 0.10.0
libtpu: 0.0.40
codegen_flags: <defaults>
</compile_context>

<pallas_src>
import jax
import jax.numpy as jnp
from jax.experimental import pallas as pl
from jax.experimental.pallas import tpu as pltpu


# --------------------------------------------------------------------------
# Kernel
# --------------------------------------------------------------------------
def _actor_kernel(
    # inputs
    state_ref, h0_ref, c0_ref,
    w_in_ref, w_lstm_ref, w_hid_ref, w_out_ref, b_all_ref,
    # outputs
    heads_ref, h_out_ref, c_out_ref,
):
    f32 = jnp.float32
    H = h0_ref.shape[1]
    A2 = heads_ref.shape[1]
    L = b_all_ref.shape[0] - 3          # number of hidden tanh layers

    state = state_ref[...]
    h0 = h0_ref[...]
    c0 = c0_ref[...]

    # input_layer (no activation before the LSTM, matching the PyTorch forward)
    x = (jnp.dot(state, w_in_ref[...], preferred_element_type=f32)
         + b_all_ref[0:1, 0:H])

    # LSTMCell: one fused (B, 4H) gate matrix, columns ordered [i | f | g | o].
    # w_lstm rows 0:H   = W_ih^T  (H_in, 4H)
    # w_lstm rows H:2H  = W_hh^T  (H,    4H)
    gates = (jnp.dot(x, w_lstm_ref[0:H, :], preferred_element_type=f32)
             + jnp.dot(h0, w_lstm_ref[H:2 * H, :], preferred_element_type=f32)
             + b_all_ref[1:2, 0:4 * H])

    i_g = jax.nn.sigmoid(gates[:, 0:H])
    f_g = jax.nn.sigmoid(gates[:, H:2 * H])
    g_g = jnp.tanh(gates[:, 2 * H:3 * H])
    o_g = jax.nn.sigmoid(gates[:, 3 * H:4 * H])

    c_new = f_g * c0 + i_g * g_g
    h_new = o_g * jnp.tanh(c_new)
    c_out_ref[...] = c_new
    h_out_ref[...] = h_new

    # hidden MLP stack with tanh (static, small trip count)
    y = h_new
    for l in range(L):
        y = jnp.tanh(jnp.dot(y, w_hid_ref[l], preferred_element_type=f32)
                     + b_all_ref[2 + l:3 + l, 0:H])

    # fused output heads: [proposal | promise] along lanes, single sigmoid
    heads_ref[...] = jax.nn.sigmoid(
        jnp.dot(y, w_out_ref[...], preferred_element_type=f32)
        + b_all_ref[2 + L:3 + L, 0:A2])


# --------------------------------------------------------------------------
# Parameter construction (PyTorch-style init) + packing for the kernel
# --------------------------------------------------------------------------
def init_actor_params(key, state_space, action_space, hidden_size, n_hidden_layers):
    """uniform(-1/sqrt(fan_in), 1/sqrt(fan_in)) init, PyTorch layout.

    Returns (packed, raw):
      packed: fused/packed tensors consumed by the Pallas kernel.
      raw:    per-layer tensors (PyTorch layout) used by the pure-JAX reference.
    """
    H, S, A, L = hidden_size, state_space, action_space, n_hidden_layers

    def lin(k, fan_in, fan_out):
        kw, kb = jax.random.split(k)
        bound = 1.0 / jnp.sqrt(jnp.float32(fan_in))
        w = jax.random.uniform(kw, (fan_in, fan_out), jnp.float32, -bound, bound)
        b = jax.random.uniform(kb, (fan_out,), jnp.float32, -bound, bound)
        return w, b

    keys = jax.random.split(key, 4 + L)

    w_in, b_in = lin(keys[0], S, H)

    # nn.LSTMCell: weight_ih (4H, H_in), weight_hh (4H, H), gate order i,f,g,o
    bound = 1.0 / jnp.sqrt(jnp.float32(H))
    k_ih, k_hh, k_bih, k_bhh = jax.random.split(keys[1], 4)
    w_ih = jax.random.uniform(k_ih, (4 * H, H), jnp.float32, -bound, bound)
    w_hh = jax.random.uniform(k_hh, (4 * H, H), jnp.float32, -bound, bound)
    b_ih = jax.random.uniform(k_bih, (4 * H,), jnp.float32, -bound, bound)
    b_hh = jax.random.uniform(k_bhh, (4 * H,), jnp.float32, -bound, bound)

    hid_w, hid_b = [], []
    for l in range(L):
        w, b = lin(keys[2 + l], H, H)
        hid_w.append(w)
        hid_b.append(b)

    w_prop, b_prop = lin(keys[2 + L], H, A)
    w_prom, b_prom = lin(keys[3 + L], H, A)

    # ---- packed layout for the kernel ----
    w_lstm = jnp.concatenate([w_ih.T, w_hh.T], axis=0)            # (2H, 4H)
    w_out = jnp.concatenate([w_prop, w_prom], axis=1)             # (H, 2A)
    w_hid = (jnp.stack(hid_w) if L > 0
             else jnp.zeros((1, H, H), jnp.float32))              # (L, H, H)

    # bias slab: row0=b_in, row1=b_ih+b_hh, rows 2..1+L=hidden, row 2+L=heads
    lane = ((max(4 * H, 2 * A, H) + 127) // 128) * 128
    b_all = jnp.zeros((L + 3, lane), jnp.float32)
    b_all = b_all.at[0, :H].set(b_in)
    b_all = b_all.at[1, :4 * H].set(b_ih + b_hh)
    for l in range(L):
        b_all = b_all.at[2 + l, :H].set(hid_b[l])
    b_all = b_all.at[2 + L, :2 * A].set(jnp.concatenate([b_prop, b_prom]))

    packed = {"w_in": w_in, "w_lstm": w_lstm, "w_hid": w_hid,
              "w_out": w_out, "b_all": b_all}
    raw = {"w_in": w_in, "b_in": b_in,
           "w_ih": w_ih, "w_hh": w_hh, "b_ih": b_ih, "b_hh": b_hh,
           "hid_w": hid_w, "hid_b": hid_b,
           "w_prop": w_prop, "b_prop": b_prop,
           "w_prom": w_prom, "b_prom": b_prom}
    return packed, raw


# --------------------------------------------------------------------------
# Wrapper
# --------------------------------------------------------------------------
def actor_forward(params, state, hidden_state=None):
    """Returns (proposal_probs, promise_probs, (h_new, c_new)).

    Note: the (h, c) arrays passed as `hidden_state` are donated into the
    kernel (aliased to the new state outputs); do not reuse them afterwards.
    """
    B = state.shape[0]
    H = params["w_in"].shape[1]
    A2 = params["w_out"].shape[1]
    A = A2 // 2

    if hidden_state is None:
        h0 = jnp.zeros((B, H), jnp.float32)
        c0 = jnp.zeros((B, H), jnp.float32)
    else:
        h0, c0 = hidden_state

    inputs = (
        state.astype(jnp.float32), h0, c0,
        params["w_in"], params["w_lstm"], params["w_hid"],
        params["w_out"], params["b_all"],
    )

    out_shapes = (
        jax.ShapeDtypeStruct((B, A2), jnp.float32),   # [proposal | promise]
        jax.ShapeDtypeStruct((B, H), jnp.float32),    # h_new
        jax.ShapeDtypeStruct((B, H), jnp.float32),    # c_new
    )

    vmem = pl.BlockSpec(memory_space=pltpu.MemorySpace.VMEM)
    heads, h_new, c_new = pl.pallas_call(
        _actor_kernel,
        out_shape=out_shapes,
        in_specs=[vmem] * len(inputs),
        out_specs=[vmem] * len(out_shapes),
        input_output_aliases={1: 1, 2: 2},   # h0 -> h_new, c0 -> c_new
    )(*inputs)

    return heads[:, :A], heads[:, A:], (h_new, c_new)


# --------------------------------------------------------------------------
# Pure-JAX reference (mirrors the PyTorch module op-for-op, unfused)
# --------------------------------------------------------------------------
def _reference_forward(raw, state, hidden_state=None):
    B = state.shape[0]
    H = raw["w_hh"].shape[1]
    if hidden_state is None:
        h0 = jnp.zeros((B, H), jnp.float32)
        c0 = jnp.zeros((B, H), jnp.float32)
    else:
        h0, c0 = hidden_state
    x = state @ raw["w_in"] + raw["b_in"]
    gates = x @ raw["w_ih"].T + raw["b_ih"] + h0 @ raw["w_hh"].T + raw["b_hh"]
    i, f, g, o = jnp.split(gates, 4, axis=1)
    i = jax.nn.sigmoid(i)
    f = jax.nn.sigmoid(f)
    g = jnp.tanh(g)
    o = jax.nn.sigmoid(o)
    c = f * c0 + i * g
    h = o * jnp.tanh(c)
    y = h
    for w, b in zip(raw["hid_w"], raw["hid_b"]):
        y = jnp.tanh(y @ w + b)
    prop = jax.nn.sigmoid(y @ raw["w_prop"] + raw["b_prop"])
    prom = jax.nn.sigmoid(y @ raw["w_prom"] + raw["b_prom"])
    return prop, prom, (h, c)


# --------------------------------------------------------------------------
if __name__ == "__main__":
    batch = 2
    state_space = 16
    action_space = 8
    hparams = {"hidden_size_actor": 32, "n_hidden_layers_actor": 2}

    key = jax.random.PRNGKey(0)
    k_params, k_s1, k_s2 = jax.random.split(key, 3)
    packed, raw = init_actor_params(
        k_params, state_space, action_space,
        hparams["hidden_size_actor"], hparams["n_hidden_layers_actor"])

    state1 = jax.random.normal(k_s1, (batch, state_space), jnp.float32)
    state2 = jax.random.normal(k_s2, (batch, state_space), jnp.float32)

    # --- step 1: hidden state starts at zero (as in the PyTorch module) ---
    prop1, prom1, hidden1 = actor_forward(packed, state1, hidden_state=None)
    jax.block_until_ready((prop1, prom1) + hidden1)

    r_prop1, r_prom1, r_hidden1 = _reference_forward(raw, state1, None)
    assert jnp.allclose(prop1, r_prop1, atol=1e-5), "step1 proposal mismatch"
    assert jnp.allclose(prom1, r_prom1, atol=1e-5), "step1 promise mismatch"
    assert jnp.allclose(hidden1[0], r_hidden1[0], atol=1e-5), "step1 h mismatch"
    assert jnp.allclose(hidden1[1], r_hidden1[1], atol=1e-5), "step1 c mismatch"

    # --- step 2: recurrent step (hidden1 buffers are donated into the call) ---
    prop2, prom2, hidden2 = actor_forward(packed, state2, hidden_state=hidden1)
    jax.block_until_ready((prop2, prom2) + hidden2)

    r_prop2, r_prom2, r_hidden2 = _reference_forward(raw, state2, r_hidden1)
    assert jnp.allclose(prop2, r_prop2, atol=1e-5), "step2 proposal mismatch"
    assert jnp.allclose(prom2, r_prom2, atol=1e-5), "step2 promise mismatch"
    assert jnp.allclose(hidden2[0], r_hidden2[0], atol=1e-5), "step2 h mismatch"
    assert jnp.allclose(hidden2[1], r_hidden2[1], atol=1e-5), "step2 c mismatch"

    print("KERNEL_OK")
</pallas_src>

<mosaic_0001>
module attributes {stable_mosaic.version = 11 : i64} {
  func.func @_actor_kernel(%arg0: memref<2x16xf32, #tpu.memory_space<vmem>>, %arg1: memref<2x32xf32, #tpu.memory_space<vmem>>, %arg2: memref<2x32xf32, #tpu.memory_space<vmem>>, %arg3: memref<16x32xf32, #tpu.memory_space<vmem>>, %arg4: memref<64x128xf32, #tpu.memory_space<vmem>>, %arg5: memref<2x32x32xf32, #tpu.memory_space<vmem>>, %arg6: memref<32x16xf32, #tpu.memory_space<vmem>>, %arg7: memref<5x128xf32, #tpu.memory_space<vmem>>, %arg8: memref<2x16xf32, #tpu.memory_space<vmem>>, %arg9: memref<2x32xf32, #tpu.memory_space<vmem>>, %arg10: memref<2x32xf32, #tpu.memory_space<vmem>>) attributes {dimension_semantics = [], scalar_prefetch = 0 : i64, scratch_operands = 0 : i64, tpu.core_type = #tpu.core_type<tc>} {
    %c0 = arith.constant 0 : index
    %c0_0 = arith.constant 0 : index
    %0 = vector.load %arg0[%c0, %c0_0] : memref<2x16xf32, #tpu.memory_space<vmem>>, vector<2x16xf32>
    %c0_1 = arith.constant 0 : index
    %c0_2 = arith.constant 0 : index
    %1 = vector.load %arg1[%c0_1, %c0_2] : memref<2x32xf32, #tpu.memory_space<vmem>>, vector<2x32xf32>
    %c0_3 = arith.constant 0 : index
    %c0_4 = arith.constant 0 : index
    %2 = vector.load %arg2[%c0_3, %c0_4] : memref<2x32xf32, #tpu.memory_space<vmem>>, vector<2x32xf32>
    %c0_5 = arith.constant 0 : index
    %c0_6 = arith.constant 0 : index
    %3 = vector.load %arg3[%c0_5, %c0_6] : memref<16x32xf32, #tpu.memory_space<vmem>>, vector<16x32xf32>
    %cst = arith.constant dense<0.000000e+00> : vector<2x32xf32>
    %4 = tpu.matmul %0, %3, %cst {dimension_numbers = #tpu.dot_dimension_numbers<[1], [0], [0], [1], [0, 0, 1, 1], [], []>} : vector<2x16xf32>, vector<16x32xf32>, vector<2x32xf32> -> vector<2x32xf32>
    %c0_7 = arith.constant 0 : index
    %c0_8 = arith.constant 0 : index
    %5 = vector.load %arg7[%c0_7, %c0_8] : memref<5x128xf32, #tpu.memory_space<vmem>>, vector<1x32xf32>
    %6 = vector.broadcast %5 : vector<1x32xf32> to vector<2x32xf32>
    %7 = arith.addf %4, %6 : vector<2x32xf32>
    %c0_9 = arith.constant 0 : index
    %c0_10 = arith.constant 0 : index
    %8 = vector.load %arg4[%c0_9, %c0_10] : memref<64x128xf32, #tpu.memory_space<vmem>>, vector<32x128xf32>
    %cst_11 = arith.constant dense<0.000000e+00> : vector<2x128xf32>
    %9 = tpu.matmul %7, %8, %cst_11 {dimension_numbers = #tpu.dot_dimension_numbers<[1], [0], [0], [1], [0, 0, 1, 1], [], []>} : vector<2x32xf32>, vector<32x128xf32>, vector<2x128xf32> -> vector<2x128xf32>
    %c32 = arith.constant 32 : index
    %c0_12 = arith.constant 0 : index
    %10 = vector.load %arg4[%c32, %c0_12] : memref<64x128xf32, #tpu.memory_space<vmem>>, vector<32x128xf32>
    %cst_13 = arith.constant dense<0.000000e+00> : vector<2x128xf32>
    %11 = tpu.matmul %1, %10, %cst_13 {dimension_numbers = #tpu.dot_dimension_numbers<[1], [0], [0], [1], [0, 0, 1, 1], [], []>} : vector<2x32xf32>, vector<32x128xf32>, vector<2x128xf32> -> vector<2x128xf32>
    %12 = arith.addf %9, %11 : vector<2x128xf32>
    %c1 = arith.constant 1 : index
    %c0_14 = arith.constant 0 : index
    %13 = vector.load %arg7[%c1, %c0_14] : memref<5x128xf32, #tpu.memory_space<vmem>>, vector<1x128xf32>
    %14 = vector.broadcast %13 : vector<1x128xf32> to vector<2x128xf32>
    %15 = arith.addf %12, %14 : vector<2x128xf32>
    %16 = vector.extract_strided_slice %15 {offsets = [0, 0], sizes = [2, 32], strides = [1, 1]} : vector<2x128xf32> to vector<2x32xf32>
    %17 = arith.negf %16 : vector<2x32xf32>
    %18 = math.exp %17 : vector<2x32xf32>
    %cst_15 = arith.constant 1.000000e+00 : f32
    %19 = vector.broadcast %cst_15 : f32 to vector<2x32xf32>
    %20 = arith.addf %19, %18 : vector<2x32xf32>
    %21 = arith.divf %19, %20 : vector<2x32xf32>
    %22 = vector.extract_strided_slice %15 {offsets = [0, 32], sizes = [2, 32], strides = [1, 1]} : vector<2x128xf32> to vector<2x32xf32>
    %23 = arith.negf %22 : vector<2x32xf32>
    %24 = math.exp %23 : vector<2x32xf32>
    %cst_16 = arith.constant 1.000000e+00 : f32
    %25 = vector.broadcast %cst_16 : f32 to vector<2x32xf32>
    %26 = arith.addf %25, %24 : vector<2x32xf32>
    %27 = arith.divf %25, %26 : vector<2x32xf32>
    %28 = vector.extract_strided_slice %15 {offsets = [0, 64], sizes = [2, 32], strides = [1, 1]} : vector<2x128xf32> to vector<2x32xf32>
    %29 = math.tanh %28 : vector<2x32xf32>
    %30 = vector.extract_strided_slice %15 {offsets = [0, 96], sizes = [2, 32], strides = [1, 1]} : vector<2x128xf32> to vector<2x32xf32>
    %31 = arith.negf %30 : vector<2x32xf32>
    %32 = math.exp %31 : vector<2x32xf32>
    %cst_17 = arith.constant 1.000000e+00 : f32
    %33 = vector.broadcast %cst_17 : f32 to vector<2x32xf32>
    %34 = arith.addf %33, %32 : vector<2x32xf32>
    %35 = arith.divf %33, %34 : vector<2x32xf32>
    %36 = arith.mulf %27, %2 : vector<2x32xf32>
    %37 = arith.mulf %21, %29 : vector<2x32xf32>
    %38 = arith.addf %36, %37 : vector<2x32xf32>
    %39 = math.tanh %38 : vector<2x32xf32>
    %40 = arith.mulf %35, %39 : vector<2x32xf32>
    %c0_18 = arith.constant 0 : index
    %c0_19 = arith.constant 0 : index
    %41 = vector.load %arg10[%c0_18, %c0_19] : memref<2x32xf32, #tpu.memory_space<vmem>>, vector<2x32xf32>
    tpu.vector_store %arg10[%c0_18, %c0_19], %38 {strides = array<i32>} : memref<2x32xf32, #tpu.memory_space<vmem>>, vector<2x32xf32>,
    %c0_20 = arith.constant 0 : index
    %c0_21 = arith.constant 0 : index
    %42 = vector.load %arg9[%c0_20, %c0_21] : memref<2x32xf32, #tpu.memory_space<vmem>>, vector<2x32xf32>
    tpu.vector_store %arg9[%c0_20, %c0_21], %40 {strides = array<i32>} : memref<2x32xf32, #tpu.memory_space<vmem>>, vector<2x32xf32>,
    %c0_22 = arith.constant 0 : index
    %c0_23 = arith.constant 0 : index
    %c0_24 = arith.constant 0 : index
    %43 = vector.load %arg5[%c0_22, %c0_23, %c0_24] : memref<2x32x32xf32, #tpu.memory_space<vmem>>, vector<1x32x32xf32>
    %44 = vector.shape_cast %43 : vector<1x32x32xf32> to vector<32x32xf32>
    %cst_25 = arith.constant dense<0.000000e+00> : vector<2x32xf32>
    %45 = tpu.matmul %40, %44, %cst_25 {dimension_numbers = #tpu.dot_dimension_numbers<[1], [0], [0], [1], [0, 0, 1, 1], [], []>} : vector<2x32xf32>, vector<32x32xf32>, vector<2x32xf32> -> vector<2x32xf32>
    %c2 = arith.constant 2 : index
    %c0_26 = arith.constant 0 : index
    %46 = vector.load %arg7[%c2, %c0_26] : memref<5x128xf32, #tpu.memory_space<vmem>>, vector<1x32xf32>
    %47 = vector.broadcast %46 : vector<1x32xf32> to vector<2x32xf32>
    %48 = arith.addf %45, %47 : vector<2x32xf32>
    %49 = math.tanh %48 : vector<2x32xf32>
    %c1_27 = arith.constant 1 : index
    %c0_28 = arith.constant 0 : index
    %c0_29 = arith.constant 0 : index
    %50 = vector.load %arg5[%c1_27, %c0_28, %c0_29] : memref<2x32x32xf32, #tpu.memory_space<vmem>>, vector<1x32x32xf32>
    %51 = vector.shape_cast %50 : vector<1x32x32xf32> to vector<32x32xf32>
    %cst_30 = arith.constant dense<0.000000e+00> : vector<2x32xf32>
    %52 = tpu.matmul %49, %51, %cst_30 {dimension_numbers = #tpu.dot_dimension_numbers<[1], [0], [0], [1], [0, 0, 1, 1], [], []>} : vector<2x32xf32>, vector<32x32xf32>, vector<2x32xf32> -> vector<2x32xf32>
    %c3 = arith.constant 3 : index
    %c0_31 = arith.constant 0 : index
    %53 = vector.load %arg7[%c3, %c0_31] : memref<5x128xf32, #tpu.memory_space<vmem>>, vector<1x32xf32>
    %54 = vector.broadcast %53 : vector<1x32xf32> to vector<2x32xf32>
    %55 = arith.addf %52, %54 : vector<2x32xf32>
    %56 = math.tanh %55 : vector<2x32xf32>
    %c0_32 = arith.constant 0 : index
    %c0_33 = arith.constant 0 : index
    %57 = vector.load %arg6[%c0_32, %c0_33] : memref<32x16xf32, #tpu.memory_space<vmem>>, vector<32x16xf32>
    %cst_34 = arith.constant dense<0.000000e+00> : vector<2x16xf32>
    %58 = tpu.matmul %56, %57, %cst_34 {dimension_numbers = #tpu.dot_dimension_numbers<[1], [0], [0], [1], [0, 0, 1, 1], [], []>} : vector<2x32xf32>, vector<32x16xf32>, vector<2x16xf32> -> vector<2x16xf32>
    %c4 = arith.constant 4 : index
    %c0_35 = arith.constant 0 : index
    %59 = vector.load %arg7[%c4, %c0_35] : memref<5x128xf32, #tpu.memory_space<vmem>>, vector<1x16xf32>
    %60 = vector.broadcast %59 : vector<1x16xf32> to vector<2x16xf32>
    %61 = arith.addf %58, %60 : vector<2x16xf32>
    %62 = arith.negf %61 : vector<2x16xf32>
    %63 = math.exp %62 : vector<2x16xf32>
    %cst_36 = arith.constant 1.000000e+00 : f32
    %64 = vector.broadcast %cst_36 : f32 to vector<2x16xf32>
    %65 = arith.addf %64, %63 : vector<2x16xf32>
    %66 = arith.divf %64, %65 : vector<2x16xf32>
    %c0_37 = arith.constant 0 : index
    %c0_38 = arith.constant 0 : index
    %67 = vector.load %arg8[%c0_37, %c0_38] : memref<2x16xf32, #tpu.memory_space<vmem>>, vector<2x16xf32>
    tpu.vector_store %arg8[%c0_37, %c0_38], %66 {strides = array<i32>} : memref<2x16xf32, #tpu.memory_space<vmem>>, vector<2x16xf32>,
    return
  }
}

</mosaic_0001>

<llo_original>
// kernel: tpu_custom_call.1
$region0: #{tpu_custom_call.1}
  #allocation0 [shape = 'u32[]', space=smem, size = 0x4, offset = 0x4, fixed_abs, tag = 'smem constant byte address 0x4 - core index']
  #allocation1 [shape = 'u32[144,128]{1,0:T(1,128)}', space=vmem, size = 0x12000, scoped, tag = 'internal scratch']
  %s0 = inlined_call_operand.vmem [shape: f32[2,16], index: 0, kind: input, shape index: {}]
  %s1 = inlined_call_operand.hbm [shape: f32[2,32], index: 1, kind: input, shape index: {}, may-alias: {1,9}]
  %s2 = inlined_call_operand.hbm [shape: f32[2,32], index: 2, kind: input, shape index: {}, may-alias: {2,10}]
  %s3 = inlined_call_operand.hbm [shape: f32[16,32], index: 3, kind: input, shape index: {}]
  %s4 = inlined_call_operand.vmem [shape: f32[64,128], index: 4, kind: input, shape index: {}]
  %s5 = inlined_call_operand.hbm [shape: f32[2,32,32], index: 5, kind: input, shape index: {}]
  %s6 = inlined_call_operand.vmem [shape: f32[32,16], index: 6, kind: input, shape index: {}]
  %s7 = inlined_call_operand.hbm [shape: f32[5,128], index: 7, kind: input, shape index: {}]
  %s8 = inlined_call_operand.hbm [shape: f32[2,16], index: 8, kind: output, shape index: {0}]
  %s9 = inlined_call_operand.hbm [shape: f32[2,32], index: 9, kind: output, shape index: {1}, may-alias: {1,9}]
  %s10 = inlined_call_operand.hbm [shape: f32[2,32], index: 10, kind: output, shape index: {2}, may-alias: {2,10}]
  %11 = xla_tuple %s8, %s9, %s10
  %s12 = sld [smem:[#allocation0]]
  $region78: #{tpu_custom_call.1} parent=0
    _
  %s14 = ssub.s32 1, %s12
  %s15 = scalar_select 0, %s14, %s12
  $region1: #{tpu_custom_call.1} parent=0
    #allocation2 [shape = 'u8[1024]{0}', space=vmem, size = 0x400, scoped, tag = 'input window, operand 1, single buffered']
    #allocation3 [shape = 's32[1]{0}', space=sflag, size = 0x4, scoped, tag = 'scoped memory for tpu_custom_call.1']
    #allocation4 [shape = 's32[1]{0}', space=sflag, size = 0x4, scoped, tag = 'scoped memory for tpu_custom_call.1']
    #allocation5 [shape = 'u8[1024]{0}', space=vmem, size = 0x400, scoped, tag = 'input window, operand 2, single buffered']
    #allocation6 [shape = 's32[1]{0}', space=sflag, size = 0x4, scoped, tag = 'scoped memory for tpu_custom_call.1']
    #allocation7 [shape = 'u8[8192]{0}', space=vmem, size = 0x2000, scoped, tag = 'input window, operand 3, single buffered']
    #allocation8 [shape = 'u8[32768]{0}', space=vmem, size = 0x8000, scoped, tag = 'input window, operand 5, single buffered']
    #allocation9 [shape = 's32[1]{0}', space=sflag, size = 0x4, scoped, tag = 'scoped memory for tpu_custom_call.1']
    #allocation10 [shape = 'u8[4096]{0}', space=vmem, size = 0x1000, scoped, tag = 'input window, operand 7, single buffered']
    #allocation11 [shape = 'u8[1024]{0}', space=vmem, size = 0x400, scoped, tag = 'output window, operand 0, single buffered']
    #allocation12 [shape = 'u8[1024]{0}', space=vmem, size = 0x400, scoped, tag = 'output window, operand 1, single buffered']
    #allocation13 [shape = 's32[1]{0}', space=sflag, size = 0x4, scoped, tag = 'scoped memory for tpu_custom_call.1']
    #allocation14 [shape = 'u8[1024]{0}', space=vmem, size = 0x400, scoped, tag = 'output window, operand 2, single buffered']
    %16 = vsyncpa [#allocation3], 0
    %17 = vsyncpa [#allocation6], 0
    %18 = vsyncpa [#allocation9], 0
    %19 = vsyncpa [#allocation4], 0
    %20 = vsyncpa [#allocation13], 0
    // Predicated region
    $region2: #{tpu_custom_call.1} parent=1 // pred_check
      _
    $region3: #{tpu_custom_call.1} parent=1 // pred_check_branch
      %22 = sbr.rel (0) target = $region5
    $region4: #{tpu_custom_call.1} parent=1 // pred_region
      _
    $region5: #{tpu_custom_call.1} parent=1 // pred_fallthru
      _
    // Predicated region
    $region6: #{tpu_custom_call.1} parent=1 // pred_check
      _
    $region7: #{tpu_custom_call.1} parent=1 // pred_check_branch
      %24 = sbr.rel (0) target = $region9
    $region8: #{tpu_custom_call.1} parent=1 // pred_region
      %s26 = ssub.s32 32, 32
      %27 = vsyncadd [#allocation3], %s26
      %s29 = sshll.u32 [#allocation2], 4
      %s30 = int_to_ptr.vmem [resolvable:$true] %s29
      %32 = dma.hbm_to_vmem [thread:$0]  %s1, 32, %s30, [#allocation3]
    $region9: #{tpu_custom_call.1} parent=1 // pred_fallthru
      _
    // Predicated region
    $region10: #{tpu_custom_call.1} parent=1 // pred_check
      _
    $region11: #{tpu_custom_call.1} parent=1 // pred_check_branch
      %34 = sbr.rel (0) target = $region13
    $region12: #{tpu_custom_call.1} parent=1 // pred_region
      %s36 = ssub.s32 32, 32
      %37 = vsyncadd [#allocation6], %s36
      %s39 = sshll.u32 [#allocation5], 4
      %s40 = int_to_ptr.vmem [resolvable:$true] %s39
      %42 = dma.hbm_to_vmem [thread:$0]  %s2, 32, %s40, [#allocation6]
    $region13: #{tpu_custom_call.1} parent=1 // pred_fallthru
      _
    // Predicated region
    $region14: #{tpu_custom_call.1} parent=1 // pred_check
      _
    $region15: #{tpu_custom_call.1} parent=1 // pred_check_branch
      %44 = sbr.rel (0) target = $region17
    $region16: #{tpu_custom_call.1} parent=1 // pred_region
      %s46 = ssub.s32 256, 256
      %47 = vsyncadd [#allocation6], %s46
      %s48 = sshll.u32 [#allocation7], 4
      %s49 = int_to_ptr.vmem [resolvable:$true] %s48
      %54 = dma.hbm_to_vmem [thread:$0]  %s3, 256, %s49, [#allocation6], 128, 128, 8
    $region17: #{tpu_custom_call.1} parent=1 // pred_fallthru
      _
    // Predicated region
    $region18: #{tpu_custom_call.1} parent=1 // pred_check
      _
    $region19: #{tpu_custom_call.1} parent=1 // pred_check_branch
      %56 = sbr.rel (0) target = $region21
    $region20: #{tpu_custom_call.1} parent=1 // pred_region
      _
    $region21: #{tpu_custom_call.1} parent=1 // pred_fallthru
      _
    // Predicated region
    $region22: #{tpu_custom_call.1} parent=1 // pred_check
      _
    $region23: #{tpu_custom_call.1} parent=1 // pred_check_branch
      %58 = sbr.rel (0) target = $region25
    $region24: #{tpu_custom_call.1} parent=1 // pred_region
      %s60 = ssub.s32 1024, 1024
      %61 = vsyncadd [#allocation9], %s60
      %s62 = sshll.u32 [#allocation8], 4
      %s63 = int_to_ptr.vmem [resolvable:$true] %s62
      %68 = dma.hbm_to_vmem [thread:$0]  %s5, 1024, %s63, [#allocation9], 128, 128, 8
    $region25: #{tpu_custom_call.1} parent=1 // pred_fallthru
      _
    // Predicated region
    $region26: #{tpu_custom_call.1} parent=1 // pred_check
      _
    $region27: #{tpu_custom_call.1} parent=1 // pred_check_branch
      %70 = sbr.rel (0) target = $region29
    $region28: #{tpu_custom_call.1} parent=1 // pred_region
      _
    $region29: #{tpu_custom_call.1} parent=1 // pred_fallthru
      _
    // Predicated region
    $region30: #{tpu_custom_call.1} parent=1 // pred_check
      _
    $region31: #{tpu_custom_call.1} parent=1 // pred_check_branch
      %72 = sbr.rel (0) target = $region33
    $region32: #{tpu_custom_call.1} parent=1 // pred_region
      %s74 = ssub.s32 128, 128
      %75 = vsyncadd [#allocation9], %s74
      %s77 = sshll.u32 [#allocation10], 4
      %s78 = int_to_ptr.vmem [resolvable:$true] %s77
      %80 = dma.hbm_to_vmem [thread:$0]  %s7, 128, %s78, [#allocation9]
    $region33: #{tpu_custom_call.1} parent=1 // pred_fallthru
      _
    // Predicated region
    $region34: #{tpu_custom_call.1} parent=1 // pred_check
      _
    $region35: #{tpu_custom_call.1} parent=1 // pred_check_branch
      %82 = sbr.rel (0) target = $region37
    $region36: #{tpu_custom_call.1} parent=1 // pred_region
      %83 = dma.done [#allocation3], 32
    $region37: #{tpu_custom_call.1} parent=1 // pred_fallthru
      _
    // Predicated region
    $region38: #{tpu_custom_call.1} parent=1 // pred_check
      _
    $region39: #{tpu_custom_call.1} parent=1 // pred_check_branch
      %85 = sbr.rel (0) target = $region41
    $region40: #{tpu_custom_call.1} parent=1 // pred_region
      %86 = dma.done [#allocation6], 32
    $region41: #{tpu_custom_call.1} parent=1 // pred_fallthru
      _
    // Predicated region
    $region42: #{tpu_custom_call.1} parent=1 // pred_check
      _
    $region43: #{tpu_custom_call.1} parent=1 // pred_check_branch
      %88 = sbr.rel (0) target = $region45
    $region44: #{tpu_custom_call.1} parent=1 // pred_region
      %89 = dma.done [#allocation6], 256
    $region45: #{tpu_custom_call.1} parent=1 // pred_fallthru
      _
    // Predicated region
    $region46: #{tpu_custom_call.1} parent=1 // pred_check
      _
    $region47: #{tpu_custom_call.1} parent=1 // pred_check_branch
      %91 = sbr.rel (0) target = $region49
    $region48: #{tpu_custom_call.1} parent=1 // pred_region
      %92 = dma.done [#allocation9], 1024
    $region49: #{tpu_custom_call.1} parent=1 // pred_fallthru
      _
    // Predicated region
    $region50: #{tpu_custom_call.1} parent=1 // pred_check
      _
    $region51: #{tpu_custom_call.1} parent=1 // pred_check_branch
      %94 = sbr.rel (0) target = $region53
    $region52: #{tpu_custom_call.1} parent=1 // pred_region
      %95 = dma.done [#allocation9], 128
    $region53: #{tpu_custom_call.1} parent=1 // pred_fallthru
      _
    %v96 = vld [vmem:[%s0] sm:$0x3]
    %v97 = vld [vmem:[#allocation2] sm:$0x3]
    %v98 = vld [vmem:[#allocation5] sm:$0x3]
    %v99 = vld [vmem:[#allocation7] sm:$0xff]
    %v100 = vld [vmem:[#allocation7 + $0x8] sm:$0xff]
    %v101 = vld [vmem:[#allocation10] sm:$0x1]
    %v102 = vlaneseq
    %v103 = vshrl.u32 %v102, 7
    %v104 = vsub.s32 0, %v103
    %v105 = vrot.slane %v101, %v104
    %vm106 = vcmask 130048
    %v108 = vsel %vm106, %v96, 0
    %110 = vmatprep.subr.mxu0 0.0
    %111 = vmatpush1.msra.mxu0 %v99
    %112 = vmatprep.subr.mxu0 0.0
    %113 = vmatpush1.msra.mxu0 %v100
    %114 = vmatprep.subr.mxu0 0.0
    %115 = vmatpush1.msra.mxu0 0.0
    %116 = vmatprep.subr.mxu0 0.0
    %117 = vmatpush1.msra.mxu0 0.0
    %118 = vmatprep.subr.mxu0 0.0
    %119 = vmatpush1.msra.mxu0 0.0
    %120 = vmatprep.subr.mxu0 0.0
    %121 = vmatpush1.msra.mxu0 0.0
    %122 = vmatprep.subr.mxu0 0.0
    %123 = vmatpush1.msra.mxu0 0.0
    %124 = vmatprep.subr.mxu0 0.0
    %125 = vmatpush1.msra.mxu0 0.0
    %126 = vmatprep.subr.mxu0 0.0
    %127 = vmatpush1.msra.mxu0 0.0
    %128 = vmatprep.subr.mxu0 0.0
    %129 = vmatpush1.msra.mxu0 0.0
    %130 = vmatprep.subr.mxu0 0.0
    %131 = vmatpush1.msra.mxu0 0.0
    %132 = vmatprep.subr.mxu0 0.0
    %133 = vmatpush1.msra.mxu0 0.0
    %134 = vmatprep.subr.mxu0 0.0
    %135 = vmatpush1.msra.mxu0 0.0
    %136 = vmatprep.subr.mxu0 0.0
    %137 = vmatpush1.msra.mxu0 0.0
    %138 = vmatprep.subr.mxu0 0.0
    %139 = vmatpush1.msra.mxu0 0.0
    %140 = vmatprep.subr.mxu0 0.0
    %141 = vmatpush1.msra.mxu0 0.0
    %142 = vmatprep.subr.mxu0 0.0
    %143 = vmatpush1.msra.mxu0 0.0
    %144 = vmatprep.subr.mxu0 0.0
    %145 = vmatpush1.msra.mxu0 0.0
    %146 = vmatprep.subr.mxu0 0.0
    %147 = vmatpush1.msra.mxu0 0.0
    %148 = vmatprep.subr.mxu0 0.0
    %149 = vmatpush1.msra.mxu0 0.0
    %150 = vmatprep.subr.mxu0 0.0
    %151 = vmatpush1.msra.mxu0 0.0
    %152 = vmatprep.subr.mxu0 0.0
    %153 = vmatpush1.msra.mxu0 0.0
    %154 = vmatprep.subr.mxu0 0.0
    %155 = vmatpush1.msra.mxu0 0.0
    %156 = vmatprep.subr.mxu0 0.0
    %157 = vmatpush1.msra.mxu0 0.0
    %158 = vmatprep.subr.mxu0 0.0
    %159 = vmatpush1.msra.mxu0 0.0
    %160 = vmatprep.subr.mxu0 0.0
    %161 = vmatpush1.msra.mxu0 0.0
    %162 = vmatprep.subr.mxu0 0.0
    %163 = vmatpush1.msra.mxu0 0.0
    %164 = vmatprep.subr.mxu0 0.0
    %165 = vmatpush1.msra.mxu0 0.0
    %166 = vmatprep.subr.mxu0 0.0
    %167 = vmatpush1.msra.mxu0 0.0
    %168 = vmatprep.subr.mxu0 0.0
    %169 = vmatpush1.msra.mxu0 0.0
    %170 = vmatprep.subr.mxu0 0.0
    %171 = vmatpush1.msra.mxu0 0.0
    %172 = vmatprep.subr.mxu0 0.0
    %173 = vmatpush1.msra.mxu0 0.0
    %174 = vmatprep.mubr.f32.mxu0 0.0
    %175 = vmatmul.mubr.f32.gmra.mrb[0].mxu0 %v108
    %v176 = vpop.f32.mrb[0].mxu0
    %v177 = vadd.f32 %v105, %v176
    %v178 = vpop.f32.mrb[0].mxu0
    %179 = vdwg.mxu0
    %v180 = vld [vmem:[%s4] sm:$0xff]
    %v181 = vld [vmem:[%s4 + $0x8] sm:$0xff]
    %v182 = vld [vmem:[%s4 + $0x10] sm:$0xff]
    %v183 = vld [vmem:[%s4 + $0x18] sm:$0xff]
    %v184 = vld [vmem:[%s4 + $0x20] sm:$0xff]
    %v185 = vld [vmem:[%s4 + $0x28] sm:$0xff]
    %v186 = vld [vmem:[%s4 + $0x30] sm:$0xff]
    %v187 = vld [vmem:[%s4 + $0x38] sm:$0xff]
    %vm188 = vcmask 261120
    %v190 = vsel %vm188, %v97, 0
    %192 = vmatprep.subr.mxu0 0.0
    %193 = vmatpush1.msra.mxu0 %v184
    %194 = vmatprep.subr.mxu0 0.0
    %195 = vmatpush1.msra.mxu0 %v185
    %196 = vmatprep.subr.mxu0 0.0
    %197 = vmatpush1.msra.mxu0 %v186
    %198 = vmatprep.subr.mxu0 0.0
    %199 = vmatpush1.msra.mxu0 %v187
    %200 = vmatprep.subr.mxu0 0.0
    %201 = vmatpush1.msra.mxu0 0.0
    %202 = vmatprep.subr.mxu0 0.0
    %203 = vmatpush1.msra.mxu0 0.0
    %204 = vmatprep.subr.mxu0 0.0
    %205 = vmatpush1.msra.mxu0 0.0
    %206 = vmatprep.subr.mxu0 0.0
    %207 = vmatpush1.msra.mxu0 0.0
    %208 = vmatprep.subr.mxu0 0.0
    %209 = vmatpush1.msra.mxu0 0.0
    %210 = vmatprep.subr.mxu0 0.0
    %211 = vmatpush1.msra.mxu0 0.0
    %212 = vmatprep.subr.mxu0 0.0
    %213 = vmatpush1.msra.mxu0 0.0
    %214 = vmatprep.subr.mxu0 0.0
    %215 = vmatpush1.msra.mxu0 0.0
    %216 = vmatprep.subr.mxu0 0.0
    %217 = vmatpush1.msra.mxu0 0.0
    %218 = vmatprep.subr.mxu0 0.0
    %219 = vmatpush1.msra.mxu0 0.0
    %220 = vmatprep.subr.mxu0 0.0
    %221 = vmatpush1.msra.mxu0 0.0
    %222 = vmatprep.subr.mxu0 0.0
    %223 = vmatpush1.msra.mxu0 0.0
    %224 = vmatprep.subr.mxu0 0.0
    %225 = vmatpush1.msra.mxu0 0.0
    %226 = vmatprep.subr.mxu0 0.0
    %227 = vmatpush1.msra.mxu0 0.0
    %228 = vmatprep.subr.mxu0 0.0
    %229 = vmatpush1.msra.mxu0 0.0
    %230 = vmatprep.subr.mxu0 0.0
    %231 = vmatpush1.msra.mxu0 0.0
    %232 = vmatprep.subr.mxu0 0.0
    %233 = vmatpush1.msra.mxu0 0.0
    %234 = vmatprep.subr.mxu0 0.0
    %235 = vmatpush1.msra.mxu0 0.0
    %236 = vmatprep.subr.mxu0 0.0
    %237 = vmatpush1.msra.mxu0 0.0
    %238 = vmatprep.subr.mxu0 0.0
    %239 = vmatpush1.msra.mxu0 0.0
    %240 = vmatprep.subr.mxu0 0.0
    %241 = vmatpush1.msra.mxu0 0.0
    %242 = vmatprep.subr.mxu0 0.0
    %243 = vmatpush1.msra.mxu0 0.0
    %244 = vmatprep.subr.mxu0 0.0
    %245 = vmatpush1.msra.mxu0 0.0
    %246 = vmatprep.subr.mxu0 0.0
    %247 = vmatpush1.msra.mxu0 0.0
    %248 = vmatprep.subr.mxu0 0.0
    %249 = vmatpush1.msra.mxu0 0.0
    %250 = vmatprep.subr.mxu0 0.0
    %251 = vmatpush1.msra.mxu0 0.0
    %252 = vmatprep.subr.mxu0 0.0
    %253 = vmatpush1.msra.mxu0 0.0
    %254 = vmatprep.subr.mxu0 0.0
    %255 = vmatpush1.msra.mxu0 0.0
    %256 = vmatprep.mubr.f32.mxu0 0.0
    %257 = vmatmul.mubr.f32.gmra.mrb[0].mxu0 %v190
    %v258 = vpop.f32.mrb[0].mxu0
    %v259 = vadd.f32 0.0, %v258
    %v260 = vpop.f32.mrb[0].mxu0
    %261 = vdwg.mxu0
    %v263 = vsel %vm188, %v177, 0
    %265 = vmatprep.subr.mxu0 0.0
    %266 = vmatpush1.msra.mxu0 %v180
    %267 = vmatprep.subr.mxu0 0.0
    %268 = vmatpush1.msra.mxu0 %v181
    %269 = vmatprep.subr.mxu0 0.0
    %270 = vmatpush1.msra.mxu0 %v182
    %271 = vmatprep.subr.mxu0 0.0
    %272 = vmatpush1.msra.mxu0 %v183
    %273 = vmatprep.subr.mxu0 0.0
    %274 = vmatpush1.msra.mxu0 0.0
    %275 = vmatprep.subr.mxu0 0.0
    %276 = vmatpush1.msra.mxu0 0.0
    %277 = vmatprep.subr.mxu0 0.0
    %278 = vmatpush1.msra.mxu0 0.0
    %279 = vmatprep.subr.mxu0 0.0
    %280 = vmatpush1.msra.mxu0 0.0
    %281 = vmatprep.subr.mxu0 0.0
    %282 = vmatpush1.msra.mxu0 0.0
    %283 = vmatprep.subr.mxu0 0.0
    %284 = vmatpush1.msra.mxu0 0.0
    %285 = vmatprep.subr.mxu0 0.0
    %286 = vmatpush1.msra.mxu0 0.0
    %287 = vmatprep.subr.mxu0 0.0
    %288 = vmatpush1.msra.mxu0 0.0
    %289 = vmatprep.subr.mxu0 0.0
    %290 = vmatpush1.msra.mxu0 0.0
    %291 = vmatprep.subr.mxu0 0.0
    %292 = vmatpush1.msra.mxu0 0.0
    %293 = vmatprep.subr.mxu0 0.0
    %294 = vmatpush1.msra.mxu0 0.0
    %295 = vmatprep.subr.mxu0 0.0
    %296 = vmatpush1.msra.mxu0 0.0
    %297 = vmatprep.subr.mxu0 0.0
    %298 = vmatpush1.msra.mxu0 0.0
    %299 = vmatprep.subr.mxu0 0.0
    %300 = vmatpush1.msra.mxu0 0.0
    %301 = vmatprep.subr.mxu0 0.0
    %302 = vmatpush1.msra.mxu0 0.0
    %303 = vmatprep.subr.mxu0 0.0
    %304 = vmatpush1.msra.mxu0 0.0
    %305 = vmatprep.subr.mxu0 0.0
    %306 = vmatpush1.msra.mxu0 0.0
    %307 = vmatprep.subr.mxu0 0.0
    %308 = vmatpush1.msra.mxu0 0.0
    %309 = vmatprep.subr.mxu0 0.0
    %310 = vmatpush1.msra.mxu0 0.0
    %311 = vmatprep.subr.mxu0 0.0
    %312 = vmatpush1.msra.mxu0 0.0
    %313 = vmatprep.subr.mxu0 0.0
    %314 = vmatpush1.msra.mxu0 0.0
    %315 = vmatprep.subr.mxu0 0.0
    %316 = vmatpush1.msra.mxu0 0.0
    %317 = vmatprep.subr.mxu0 0.0
    %318 = vmatpush1.msra.mxu0 0.0
    %319 = vmatprep.subr.mxu0 0.0
    %320 = vmatpush1.msra.mxu0 0.0
    %321 = vmatprep.subr.mxu0 0.0
    %322 = vmatpush1.msra.mxu0 0.0
    %323 = vmatprep.subr.mxu0 0.0
    %324 = vmatpush1.msra.mxu0 0.0
    %325 = vmatprep.subr.mxu0 0.0
    %326 = vmatpush1.msra.mxu0 0.0
    %327 = vmatprep.subr.mxu0 0.0
    %328 = vmatpush1.msra.mxu0 0.0
    %329 = vmatprep.mubr.f32.mxu0 0.0
    %330 = vmatmul.mubr.f32.gmra.mrb[0].mxu0 %v263
    %v331 = vpop.f32.mrb[0].mxu0
    %v332 = vadd.f32 %v259, %v331
    %v333 = vpop.f32.mrb[0].mxu0
    %334 = vdwg.mxu0
    %v335 = vld [vmem:[#allocation10 + $0x1] sm:$0x1]
    %v336 = vlaneseq
    %v337 = vshrl.u32 %v336, 7
    %v338 = vsub.s32 0, %v337
    %v339 = vrot.slane %v335, %v338
    %v340 = vadd.f32 %v332, %v339
    %v341 = vxor.u32 %v340, 2147483648
    %v342 = vmul.f32 %v341, 1.442695
    %v343 = vpow.pop %v342
    %v344 = vadd.f32 %v343, 1.0
    %v345 = vrcp.pop %v344
    %v346 = vmul.f32 1.0, %v345
    %v347 = vtanh.pop %v340
    %349 = vrot.lane.b32.xlu0 %v98, 32
    %v350 = vpop.permute.xlu0 %349
    %v352 = vmul.f32 %v346, %v350
    %354 = vrot.lane.b32.xlu0 %v347, 64
    %v355 = vpop.permute.xlu0 %354
    %v357 = vmul.f32 %v346, %v355
    %359 = vrot.lane.b32.xlu0 %v357, 32
    %v360 = vpop.permute.xlu0 %359
    %v362 = vadd.f32 %v352, %v360
    %v363 = vtanh.pop %v362
    %365 = vrot.lane.b32.xlu0 %v363, 64
    %v366 = vpop.permute.xlu0 %365
    %v368 = vmul.f32 %v346, %v366
    %370 = vrot.lane.b32.xlu0 %v362, 96
    %v371 = vpop.permute.xlu0 %370
    %vm373 = vcmask 254976
    %374 = vst.msk [vmem:[#allocation14] sm:$0x3] %vm373, %v371
    %376 = vrot.lane.b32.xlu0 %v368, 32
    %v377 = vpop.permute.xlu0 %376
    %379 = vst.msk [vmem:[#allocation12] sm:$0x3] %vm373, %v377
    %v380 = vld [vmem:[#allocation8] sm:$0xff]
    %v381 = vld [vmem:[#allocation8 + $0x8] sm:$0xff]
    %v382 = vld [vmem:[#allocation8 + $0x10] sm:$0xff]
    %v383 = vld [vmem:[#allocation8 + $0x18] sm:$0xff]
    %v384 = vld [vmem:[#allocation10 + $0x2] sm:$0x1]
    %v385 = vlaneseq
    %v386 = vshrl.u32 %v385, 7
    %v387 = vsub.s32 0, %v386
    %v388 = vrot.slane %v384, %v387
    %v389 = vsel %vm188, %v377, 0
    %391 = vmatprep.subr.mxu0 0.0
    %392 = vmatpush1.msra.mxu0 %v380
    %393 = vmatprep.subr.mxu0 0.0
    %394 = vmatpush1.msra.mxu0 %v381
    %395 = vmatprep.subr.mxu0 0.0
    %396 = vmatpush1.msra.mxu0 %v382
    %397 = vmatprep.subr.mxu0 0.0
    %398 = vmatpush1.msra.mxu0 %v383
    %399 = vmatprep.subr.mxu0 0.0
    %400 = vmatpush1.msra.mxu0 0.0
    %401 = vmatprep.subr.mxu0 0.0
    %402 = vmatpush1.msra.mxu0 0.0
    %403 = vmatprep.subr.mxu0 0.0
    %404 = vmatpush1.msra.mxu0 0.0
    %405 = vmatprep.subr.mxu0 0.0
    %406 = vmatpush1.msra.mxu0 0.0
    %407 = vmatprep.subr.mxu0 0.0
    %408 = vmatpush1.msra.mxu0 0.0
    %409 = vmatprep.subr.mxu0 0.0
    %410 = vmatpush1.msra.mxu0 0.0
    %411 = vmatprep.subr.mxu0 0.0
    %412 = vmatpush1.msra.mxu0 0.0
    %413 = vmatprep.subr.mxu0 0.0
    %414 = vmatpush1.msra.mxu0 0.0
    %415 = vmatprep.subr.mxu0 0.0
    %416 = vmatpush1.msra.mxu0 0.0
    %417 = vmatprep.subr.mxu0 0.0
    %418 = vmatpush1.msra.mxu0 0.0
    %419 = vmatprep.subr.mxu0 0.0
    %420 = vmatpush1.msra.mxu0 0.0
    %421 = vmatprep.subr.mxu0 0.0
    %422 = vmatpush1.msra.mxu0 0.0
    %423 = vmatprep.subr.mxu0 0.0
    %424 = vmatpush1.msra.mxu0 0.0
    %425 = vmatprep.subr.mxu0 0.0
    %426 = vmatpush1.msra.mxu0 0.0
    %427 = vmatprep.subr.mxu0 0.0
    %428 = vmatpush1.msra.mxu0 0.0
    %429 = vmatprep.subr.mxu0 0.0
    %430 = vmatpush1.msra.mxu0 0.0
    %431 = vmatprep.subr.mxu0 0.0
    %432 = vmatpush1.msra.mxu0 0.0
    %433 = vmatprep.subr.mxu0 0.0
    %434 = vmatpush1.msra.mxu0 0.0
    %435 = vmatprep.subr.mxu0 0.0
    %436 = vmatpush1.msra.mxu0 0.0
    %437 = vmatprep.subr.mxu0 0.0
    %438 = vmatpush1.msra.mxu0 0.0
    %439 = vmatprep.subr.mxu0 0.0
    %440 = vmatpush1.msra.mxu0 0.0
    %441 = vmatprep.subr.mxu0 0.0
    %442 = vmatpush1.msra.mxu0 0.0
    %443 = vmatprep.subr.mxu0 0.0
    %444 = vmatpush1.msra.mxu0 0.0
    %445 = vmatprep.subr.mxu0 0.0
    %446 = vmatpush1.msra.mxu0 0.0
    %447 = vmatprep.subr.mxu0 0.0
    %448 = vmatpush1.msra.mxu0 0.0
    %449 = vmatprep.subr.mxu0 0.0
    %450 = vmatpush1.msra.mxu0 0.0
    %451 = vmatprep.subr.mxu0 0.0
    %452 = vmatpush1.msra.mxu0 0.0
    %453 = vmatprep.subr.mxu0 0.0
    %454 = vmatpush1.msra.mxu0 0.0
    %455 = vmatprep.mubr.f32.mxu0 0.0
    %456 = vmatmul.mubr.f32.gmra.mrb[0].mxu0 %v389
    %v457 = vpop.f32.mrb[0].mxu0
    %v458 = vadd.f32 %v388, %v457
    %v459 = vpop.f32.mrb[0].mxu0
    %460 = vdwg.mxu0
    %v461 = vtanh.pop %v458
    %s462 = scalar_lea.vmem [#allocation8], 32
    %v463 = vld [vmem:[%s462] sm:$0xff]
    %v464 = vld [vmem:[%s462 + $0x8] sm:$0xff]
    %v465 = vld [vmem:[%s462 + $0x10] sm:$0xff]
    %v466 = vld [vmem:[%s462 + $0x18] sm:$0xff]
    %v467 = vld [vmem:[#allocation10 + $0x3] sm:$0x1]
    %v468 = vlaneseq
    %v469 = vshrl.u32 %v468, 7
    %v470 = vsub.s32 0, %v469
    %v471 = vrot.slane %v467, %v470
    %v473 = vsel %vm188, %v461, 0
    %475 = vmatprep.subr.mxu0 0.0
    %476 = vmatpush1.msra.mxu0 %v463
    %477 = vmatprep.subr.mxu0 0.0
    %478 = vmatpush1.msra.mxu0 %v464
    %479 = vmatprep.subr.mxu0 0.0
    %480 = vmatpush1.msra.mxu0 %v465
    %481 = vmatprep.subr.mxu0 0.0
    %482 = vmatpush1.msra.mxu0 %v466
    %483 = vmatprep.subr.mxu0 0.0
    %484 = vmatpush1.msra.mxu0 0.0
    %485 = vmatprep.subr.mxu0 0.0
    %486 = vmatpush1.msra.mxu0 0.0
    %487 = vmatprep.subr.mxu0 0.0
    %488 = vmatpush1.msra.mxu0 0.0
    %489 = vmatprep.subr.mxu0 0.0
    %490 = vmatpush1.msra.mxu0 0.0
    %491 = vmatprep.subr.mxu0 0.0
    %492 = vmatpush1.msra.mxu0 0.0
    %493 = vmatprep.subr.mxu0 0.0
    %494 = vmatpush1.msra.mxu0 0.0
    %495 = vmatprep.subr.mxu0 0.0
    %496 = vmatpush1.msra.mxu0 0.0
    %497 = vmatprep.subr.mxu0 0.0
    %498 = vmatpush1.msra.mxu0 0.0
    %499 = vmatprep.subr.mxu0 0.0
    %500 = vmatpush1.msra.mxu0 0.0
    %501 = vmatprep.subr.mxu0 0.0
    %502 = vmatpush1.msra.mxu0 0.0
    %503 = vmatprep.subr.mxu0 0.0
    %504 = vmatpush1.msra.mxu0 0.0
    %505 = vmatprep.subr.mxu0 0.0
    %506 = vmatpush1.msra.mxu0 0.0
    %507 = vmatprep.subr.mxu0 0.0
    %508 = vmatpush1.msra.mxu0 0.0
    %509 = vmatprep.subr.mxu0 0.0
    %510 = vmatpush1.msra.mxu0 0.0
    %511 = vmatprep.subr.mxu0 0.0
    %512 = vmatpush1.msra.mxu0 0.0
    %513 = vmatprep.subr.mxu0 0.0
    %514 = vmatpush1.msra.mxu0 0.0
    %515 = vmatprep.subr.mxu0 0.0
    %516 = vmatpush1.msra.mxu0 0.0
    %517 = vmatprep.subr.mxu0 0.0
    %518 = vmatpush1.msra.mxu0 0.0
    %519 = vmatprep.subr.mxu0 0.0
    %520 = vmatpush1.msra.mxu0 0.0
    %521 = vmatprep.subr.mxu0 0.0
    %522 = vmatpush1.msra.mxu0 0.0
    %523 = vmatprep.subr.mxu0 0.0
    %524 = vmatpush1.msra.mxu0 0.0
    %525 = vmatprep.subr.mxu0 0.0
    %526 = vmatpush1.msra.mxu0 0.0
    %527 = vmatprep.subr.mxu0 0.0
    %528 = vmatpush1.msra.mxu0 0.0
    %529 = vmatprep.subr.mxu0 0.0
    %530 = vmatpush1.msra.mxu0 0.0
    %531 = vmatprep.subr.mxu0 0.0
    %532 = vmatpush1.msra.mxu0 0.0
    %533 = vmatprep.subr.mxu0 0.0
    %534 = vmatpush1.msra.mxu0 0.0
    %535 = vmatprep.subr.mxu0 0.0
    %536 = vmatpush1.msra.mxu0 0.0
    %537 = vmatprep.subr.mxu0 0.0
    %538 = vmatpush1.msra.mxu0 0.0
    %539 = vmatprep.mubr.f32.mxu0 0.0
    %540 = vmatmul.mubr.f32.gmra.mrb[0].mxu0 %v473
    %v541 = vpop.f32.mrb[0].mxu0
    %v542 = vadd.f32 %v471, %v541
    %v543 = vpop.f32.mrb[0].mxu0
    %544 = vdwg.mxu0
    %v545 = vtanh.pop %v542
    %v546 = vld [vmem:[%s6] sm:$0xff]
    %v547 = vld [vmem:[%s6 + $0x8] sm:$0xff]
    %v548 = vld [vmem:[%s6 + $0x10] sm:$0xff]
    %v549 = vld [vmem:[%s6 + $0x18] sm:$0xff]
    %v550 = vld [vmem:[#allocation10 + $0x4] sm:$0x1]
    %v551 = vlaneseq
    %v552 = vshrl.u32 %v551, 7
    %v553 = vsub.s32 0, %v552
    %v554 = vrot.slane %v550, %v553
    %v556 = vsel %vm188, %v545, 0
    %558 = vmatprep.subr.mxu0 0.0
    %559 = vmatpush1.msra.mxu0 %v546
    %560 = vmatprep.subr.mxu0 0.0
    %561 = vmatpush1.msra.mxu0 %v547
    %562 = vmatprep.subr.mxu0 0.0
    %563 = vmatpush1.msra.mxu0 %v548
    %564 = vmatprep.subr.mxu0 0.0
    %565 = vmatpush1.msra.mxu0 %v549
    %566 = vmatprep.subr.mxu0 0.0
    %567 = vmatpush1.msra.mxu0 0.0
    %568 = vmatprep.subr.mxu0 0.0
    %569 = vmatpush1.msra.mxu0 0.0
    %570 = vmatprep.subr.mxu0 0.0
    %571 = vmatpush1.msra.mxu0 0.0
    %572 = vmatprep.subr.mxu0 0.0
    %573 = vmatpush1.msra.mxu0 0.0
    %574 = vmatprep.subr.mxu0 0.0
    %575 = vmatpush1.msra.mxu0 0.0
    %576 = vmatprep.subr.mxu0 0.0
    %577 = vmatpush1.msra.mxu0 0.0
    %578 = vmatprep.subr.mxu0 0.0
    %579 = vmatpush1.msra.mxu0 0.0
    %580 = vmatprep.subr.mxu0 0.0
    %581 = vmatpush1.msra.mxu0 0.0
    %582 = vmatprep.subr.mxu0 0.0
    %583 = vmatpush1.msra.mxu0 0.0
    %584 = vmatprep.subr.mxu0 0.0
    %585 = vmatpush1.msra.mxu0 0.0
    %586 = vmatprep.subr.mxu0 0.0
    %587 = vmatpush1.msra.mxu0 0.0
    %588 = vmatprep.subr.mxu0 0.0
    %589 = vmatpush1.msra.mxu0 0.0
    %590 = vmatprep.subr.mxu0 0.0
    %591 = vmatpush1.msra.mxu0 0.0
    %592 = vmatprep.subr.mxu0 0.0
    %593 = vmatpush1.msra.mxu0 0.0
    %594 = vmatprep.subr.mxu0 0.0
    %595 = vmatpush1.msra.mxu0 0.0
    %596 = vmatprep.subr.mxu0 0.0
    %597 = vmatpush1.msra.mxu0 0.0
    %598 = vmatprep.subr.mxu0 0.0
    %599 = vmatpush1.msra.mxu0 0.0
    %600 = vmatprep.subr.mxu0 0.0
    %601 = vmatpush1.msra.mxu0 0.0
    %602 = vmatprep.subr.mxu0 0.0
    %603 = vmatpush1.msra.mxu0 0.0
    %604 = vmatprep.subr.mxu0 0.0
    %605 = vmatpush1.msra.mxu0 0.0
    %606 = vmatprep.subr.mxu0 0.0
    %607 = vmatpush1.msra.mxu0 0.0
    %608 = vmatprep.subr.mxu0 0.0
    %609 = vmatpush1.msra.mxu0 0.0
    %610 = vmatprep.subr.mxu0 0.0
    %611 = vmatpush1.msra.mxu0 0.0
    %612 = vmatprep.subr.mxu0 0.0
    %613 = vmatpush1.msra.mxu0 0.0
    %614 = vmatprep.subr.mxu0 0.0
    %615 = vmatpush1.msra.mxu0 0.0
    %616 = vmatprep.subr.mxu0 0.0
    %617 = vmatpush1.msra.mxu0 0.0
    %618 = vmatprep.subr.mxu0 0.0
    %619 = vmatpush1.msra.mxu0 0.0
    %620 = vmatprep.subr.mxu0 0.0
    %621 = vmatpush1.msra.mxu0 0.0
    %622 = vmatprep.mubr.f32.mxu0 0.0
    %623 = vmatmul.mubr.f32.gmra.mrb[0].mxu0 %v556
    %v624 = vpop.f32.mrb[0].mxu0
    %v625 = vadd.f32 %v554, %v624
    %v626 = vpop.f32.mrb[0].mxu0
    %627 = vdwg.mxu0
    %v628 = vxor.u32 %v625, 2147483648
    %v629 = vmul.f32 %v628, 1.442695
    %v630 = vpow.pop %v629
    %v631 = vadd.f32 %v630, 1.0
    %v632 = vrcp.pop %v631
    %v633 = vmul.f32 1.0, %v632
    %vm634 = vcmask 123904
    %635 = vst.msk [vmem:[#allocation11] sm:$0x3] %vm634, %v633
    // Predicated region
    $region54: #{tpu_custom_call.1} parent=1 // pred_check
      _
    $region55: #{tpu_custom_call.1} parent=1 // pred_check_branch
      %637 = sbr.rel (0) target = $region57
    $region56: #{tpu_custom_call.1} parent=1 // pred_region
      %s639 = ssub.s32 32, 32
      %640 = vsyncadd [#allocation4], %s639
      %s642 = sshll.u32 [#allocation11], 4
      %s643 = int_to_ptr.vmem [resolvable:$true] %s642
      %645 = dma.vmem_to_hbm [thread:$0]  %s643, 32, %s8, [#allocation4]
    $region57: #{tpu_custom_call.1} parent=1 // pred_fallthru
      _
    // Predicated region
    $region58: #{tpu_custom_call.1} parent=1 // pred_check
      _
    $region59: #{tpu_custom_call.1} parent=1 // pred_check_branch
      %647 = sbr.rel (0) target = $region61
    $region60: #{tpu_custom_call.1} parent=1 // pred_region
      %s649 = ssub.s32 32, 32
      %650 = vsyncadd [#allocation13], %s649
      %s652 = sshll.u32 [#allocation12], 4
      %s653 = int_to_ptr.vmem [resolvable:$true] %s652
      %655 = dma.vmem_to_hbm [thread:$0]  %s653, 32, %s9, [#allocation13]
    $region61: #{tpu_custom_call.1} parent=1 // pred_fallthru
      _
    // Predicated region
    $region62: #{tpu_custom_call.1} parent=1 // pred_check
      _
    $region63: #{tpu_custom_call.1} parent=1 // pred_check_branch
      %657 = sbr.rel (0) target = $region65
    $region64: #{tpu_custom_call.1} parent=1 // pred_region
      %s659 = ssub.s32 32, 32
      %660 = vsyncadd [#allocation13], %s659
      %s662 = sshll.u32 [#allocation14], 4
      %s663 = int_to_ptr.vmem [resolvable:$true] %s662
      %665 = dma.vmem_to_hbm [thread:$0]  %s663, 32, %s10, [#allocation13]
    $region65: #{tpu_custom_call.1} parent=1 // pred_fallthru
      _
    // Predicated region
    $region66: #{tpu_custom_call.1} parent=1 // pred_check
      _
    $region67: #{tpu_custom_call.1} parent=1 // pred_check_branch
      %667 = sbr.rel (0) target = $region69
    $region68: #{tpu_custom_call.1} parent=1 // pred_region
      %668 = dma.done [#allocation4], 32
    $region69: #{tpu_custom_call.1} parent=1 // pred_fallthru
      _
    // Predicated region
    $region70: #{tpu_custom_call.1} parent=1 // pred_check
      _
    $region71: #{tpu_custom_call.1} parent=1 // pred_check_branch
      %670 = sbr.rel (0) target = $region73
    $region72: #{tpu_custom_call.1} parent=1 // pred_region
      %671 = dma.done [#allocation13], 32
    $region73: #{tpu_custom_call.1} parent=1 // pred_fallthru
      _
    // Predicated region
    $region74: #{tpu_custom_call.1} parent=1 // pred_check
      _
    $region75: #{tpu_custom_call.1} parent=1 // pred_check_branch
      %673 = sbr.rel (0) target = $region77
    $region76: #{tpu_custom_call.1} parent=1 // pred_region
      %674 = dma.done [#allocation13], 32
    $region77: #{tpu_custom_call.1} parent=1 // pred_fallthru
      _
    %675 = vsyncpa [#allocation3], 1
    %676 = vsyncpa [#allocation6], 1
    %677 = vsyncpa [#allocation9], 1
    %678 = vsyncpa [#allocation4], 1
    %679 = vsyncpa [#allocation13], 1

</llo_original>
